<compile_context>
chip_gen: v5e
topology: v5e:2x2
jax: 0.10.0
libtpu: 0.0.40
codegen_flags: <defaults>
</compile_context>

<pallas_src>
from functools import partial

import jax
import jax.numpy as jnp
from jax.experimental import pallas as pl
from jax.experimental.pallas import tpu as pltpu


def conv1x1_sigmoid_kernel(x_ref, w_ref, b_ref, o_ref):
    # x_ref: [C_in, 1]        single pixel, channels on sublanes
    # w_ref: [C_in, C_out_p]  C_out lane-major, padded to a multiple of 128
    # b_ref: [1, C_out_p]
    # o_ref: [1, C_out_p]     lane-dense output
    prod = x_ref[...] * w_ref[...]                            # VPU: lane-broadcast multiply
    acc = b_ref[...] + jnp.sum(prod, axis=0, keepdims=True)   # XLU sublane reduce + bias fold
    # sigmoid(a) = 0.5 * (tanh(0.5 * a) + 1): single EUP push, overflow-free, exact.
    o_ref[...] = (0.5 * (jnp.tanh(0.5 * acc) + 1.0)).astype(o_ref.dtype)


def prepare_conv1x1_sigmoid_params(weight, bias):
    """One-time parameter prep (do this at load time, NOT per call).

    weight: [C_out, C_in, 1, 1], bias: [C_out].
    Returns (w2d_padded [C_in, C_out_p], b2d_padded [1, C_out_p], c_out).
    """
    c_out, c_in = weight.shape[0], weight.shape[1]
    c_out_p = ((c_out + 127) // 128) * 128                    # 672 -> 768: lane-dense stores
    w2d = weight.reshape(c_out, c_in).T                       # [C_in, C_out], C_out on lanes
    w2d_p = jnp.pad(w2d, ((0, 0), (0, c_out_p - c_out)))
    b2d_p = jnp.pad(bias.reshape(1, c_out), ((0, 0), (0, c_out_p - c_out)))
    return jnp.asarray(w2d_p), jnp.asarray(b2d_p), c_out


@partial(jax.jit, static_argnames=("c_out",))
def conv2d_1x1_sigmoid(x_nchw, w2d_padded, b2d_padded, *, c_out):
    """x_nchw: [N, C_in, H, W] with N*H*W == 1.  Returns NCHW [N, C_out, H, W]."""
    n, c_in, h, w = x_nchw.shape
    assert n * h * w == 1, "kernel specialized to a single spatial position (N*H*W == 1)"
    c_out_p = w2d_padded.shape[1]

    x_col = x_nchw.reshape(c_in, 1)                           # [C_in, 1]: channels on sublanes

    # Gridless pallas_call: whole problem resident in VMEM, no pipeline machinery.
    out_p = pl.pallas_call(
        conv1x1_sigmoid_kernel,
        out_shape=jax.ShapeDtypeStruct((1, c_out_p), x_nchw.dtype),
        in_specs=[
            pl.BlockSpec(memory_space=pltpu.MemorySpace.VMEM),
            pl.BlockSpec(memory_space=pltpu.MemorySpace.VMEM),
            pl.BlockSpec(memory_space=pltpu.MemorySpace.VMEM),
        ],
        out_specs=pl.BlockSpec(memory_space=pltpu.MemorySpace.VMEM),
    )(x_col, w2d_padded, b2d_padded)

    # Drop the lane padding; H = W = 1 so NCHW is a pure reshape (no transpose).
    return out_p[:, :c_out].reshape(n, c_out, h, w)


if __name__ == "__main__":
    C_IN, C_OUT = 28, 672
    N, H, W = 1, 1, 1

    key = jax.random.PRNGKey(0)
    k_x, k_w, k_b = jax.random.split(key, 3)

    # Deterministic parameter init (Kaiming-uniform-like bounds of Conv2d).
    fan_in = C_IN * 1 * 1
    w_bound = (1.0 / fan_in) ** 0.5
    weight = jax.random.uniform(
        k_w, (C_OUT, C_IN, 1, 1), jnp.float32, -w_bound, w_bound)
    bias = jax.random.uniform(k_b, (C_OUT,), jnp.float32, -w_bound, w_bound)

    x = jax.random.normal(k_x, (N, C_IN, H, W), jnp.float32)

    # One-time weight/bias layout prep (hoisted out of the per-call path).
    w2d_p, b2d_p, c_out = prepare_conv1x1_sigmoid_params(weight, bias)
    jax.block_until_ready((w2d_p, b2d_p))

    out = conv2d_1x1_sigmoid(x, w2d_p, b2d_p, c_out=c_out)
    jax.block_until_ready(out)

    # Reference check in plain JAX (exact sigmoid in-kernel -> tight tolerance).
    ref = jax.nn.sigmoid(
        jnp.einsum("nchw,oc->nohw", x, weight.reshape(C_OUT, C_IN))
        + bias.reshape(1, C_OUT, 1, 1))
    assert out.shape == (N, C_OUT, H, W)
    assert jnp.allclose(out, ref, atol=1e-5, rtol=1e-5), \
        f"max abs err {jnp.max(jnp.abs(out - ref))}"

    print("KERNEL_OK")
</pallas_src>

<mosaic_0001>
module attributes {stable_mosaic.version = 11 : i64} {
  func.func @conv1x1_sigmoid_kernel(%arg0: memref<28x1xf32, #tpu.memory_space<vmem>>, %arg1: memref<28x768xf32, #tpu.memory_space<vmem>>, %arg2: memref<1x768xf32, #tpu.memory_space<vmem>>, %arg3: memref<1x768xf32, #tpu.memory_space<vmem>>) attributes {dimension_semantics = [], scalar_prefetch = 0 : i64, scratch_operands = 0 : i64, tpu.core_type = #tpu.core_type<tc>} {
    %c0 = arith.constant 0 : index
    %c0_0 = arith.constant 0 : index
    %0 = vector.load %arg0[%c0, %c0_0] : memref<28x1xf32, #tpu.memory_space<vmem>>, vector<28x1xf32>
    %c0_1 = arith.constant 0 : index
    %c0_2 = arith.constant 0 : index
    %1 = vector.load %arg1[%c0_1, %c0_2] : memref<28x768xf32, #tpu.memory_space<vmem>>, vector<28x768xf32>
    %2 = vector.broadcast %0 : vector<28x1xf32> to vector<28x768xf32>
    %3 = arith.mulf %2, %1 : vector<28x768xf32>
    %c0_3 = arith.constant 0 : index
    %c0_4 = arith.constant 0 : index
    %4 = vector.load %arg2[%c0_3, %c0_4] : memref<1x768xf32, #tpu.memory_space<vmem>>, vector<1x768xf32>
    %cst = arith.constant dense<0.000000e+00> : vector<768xf32>
    %5 = vector.multi_reduction <add>, %3, %cst [0] : vector<28x768xf32> to vector<768xf32>
    %6 = vector.shape_cast %5 : vector<768xf32> to vector<1x768xf32>
    %7 = arith.addf %4, %6 : vector<1x768xf32>
    %cst_5 = arith.constant 5.000000e-01 : f32
    %8 = vector.broadcast %cst_5 : f32 to vector<1x768xf32>
    %9 = arith.mulf %8, %7 : vector<1x768xf32>
    %10 = math.tanh %9 : vector<1x768xf32>
    %cst_6 = arith.constant 1.000000e+00 : f32
    %11 = vector.broadcast %cst_6 : f32 to vector<1x768xf32>
    %12 = arith.addf %10, %11 : vector<1x768xf32>
    %cst_7 = arith.constant 5.000000e-01 : f32
    %13 = vector.broadcast %cst_7 : f32 to vector<1x768xf32>
    %14 = arith.mulf %13, %12 : vector<1x768xf32>
    %c0_8 = arith.constant 0 : index
    %c0_9 = arith.constant 0 : index
    %15 = vector.load %arg3[%c0_8, %c0_9] : memref<1x768xf32, #tpu.memory_space<vmem>>, vector<1x768xf32>
    tpu.vector_store %arg3[%c0_8, %c0_9], %14 {strides = array<i32>} : memref<1x768xf32, #tpu.memory_space<vmem>>, vector<1x768xf32>,
    return
  }
}

</mosaic_0001>

<llo_original>
// kernel: conv2d_1x1_sigmoid.1
$region0: #{conv2d_1x1_sigmoid.1}
  #allocation0 [shape = 'u32[]', space=smem, size = 0x4, offset = 0x4, fixed_abs, tag = 'smem constant byte address 0x4 - core index']
  #allocation1 [shape = 'u32[72,128]{1,0:T(1,128)}', space=vmem, size = 0x9000, scoped, tag = 'internal scratch']
  %s0 = inlined_call_operand.vmem [shape: f32[28,1], index: 0, kind: input, shape index: {}]
  %s1 = inlined_call_operand.hbm [shape: f32[28,768], index: 1, kind: input, shape index: {}]
  %s2 = inlined_call_operand.vmem [shape: f32[1,768], index: 2, kind: input, shape index: {}]
  %s3 = inlined_call_operand.vmem [shape: f32[1,768], index: 3, kind: output, shape index: {}]
  %s4 = sld [smem:[#allocation0]]
  $region26: #{conv2d_1x1_sigmoid.1} parent=0
    _
  %s6 = ssub.s32 1, %s4
  %s7 = scalar_select 0, %s6, %s4
  $region1: #{conv2d_1x1_sigmoid.1} parent=0
    #allocation2 [shape = 'u8[98304]{0}', space=vmem, size = 0x18000, scoped, tag = 'input window, operand 1, single buffered']
    #allocation3 [shape = 's32[1]{0}', space=sflag, size = 0x4, scoped, tag = 'scoped memory for conv2d_1x1_sigmoid.1']
    %8 = vsyncpa [#allocation3], 0
    // Predicated region
    $region2: #{conv2d_1x1_sigmoid.1} parent=1 // pred_check
      _
    $region3: #{conv2d_1x1_sigmoid.1} parent=1 // pred_check_branch
      %10 = sbr.rel (0) target = $region5
    $region4: #{conv2d_1x1_sigmoid.1} parent=1 // pred_region
      _
    $region5: #{conv2d_1x1_sigmoid.1} parent=1 // pred_fallthru
      _
    // Predicated region
    $region6: #{conv2d_1x1_sigmoid.1} parent=1 // pred_check
      _
    $region7: #{conv2d_1x1_sigmoid.1} parent=1 // pred_check_branch
      %12 = sbr.rel (0) target = $region9
    $region8: #{conv2d_1x1_sigmoid.1} parent=1 // pred_region
      %14 = vsyncadd [#allocation3], 0
      %s15 = sshll.u32 %s1, 4
      %s16 = int_to_ptr.hbm [resolvable:$true] %s15
      %s17 = sshll.u32 [#allocation2], 4
      %s18 = int_to_ptr.vmem [resolvable:$true] %s17
      %23 = dma.hbm_to_vmem [thread:$0]  %s16, 3072, %s18, [#allocation3], 768, 768, 48
    $region9: #{conv2d_1x1_sigmoid.1} parent=1 // pred_fallthru
      _
    // Predicated region
    $region10: #{conv2d_1x1_sigmoid.1} parent=1 // pred_check
      _
    $region11: #{conv2d_1x1_sigmoid.1} parent=1 // pred_check_branch
      %25 = sbr.rel (0) target = $region13
    $region12: #{conv2d_1x1_sigmoid.1} parent=1 // pred_region
      _
    $region13: #{conv2d_1x1_sigmoid.1} parent=1 // pred_fallthru
      _
    // Predicated region
    $region14: #{conv2d_1x1_sigmoid.1} parent=1 // pred_check
      _
    $region15: #{conv2d_1x1_sigmoid.1} parent=1 // pred_check_branch
      %27 = sbr.rel (0) target = $region17
    $region16: #{conv2d_1x1_sigmoid.1} parent=1 // pred_region
      %29 = dma.done [#allocation3], 3072
    $region17: #{conv2d_1x1_sigmoid.1} parent=1 // pred_fallthru
      _
    %v30 = vld [vmem:[%s0] sm:$0xff]
    %v31 = vld [vmem:[%s0 + $0x8] sm:$0xff]
    %v32 = vld [vmem:[%s0 + $0x10] sm:$0xff]
    %v33 = vld [vmem:[%s0 + $0x18] sm:$0xf]
    %v34 = vld [vmem:[#allocation2] sm:$0xff]
    %v35 = vld [vmem:[#allocation2 + $0x8] sm:$0xff]
    %v36 = vld [vmem:[#allocation2 + $0x10] sm:$0xff]
    %v37 = vld [vmem:[#allocation2 + $0x18] sm:$0xff]
    %v38 = vld [vmem:[#allocation2 + $0x20] sm:$0xff]
    %v39 = vld [vmem:[#allocation2 + $0x28] sm:$0xff]
    %v40 = vld [vmem:[#allocation2 + $0x30] sm:$0xff]
    %v41 = vld [vmem:[#allocation2 + $0x38] sm:$0xff]
    %v42 = vld [vmem:[#allocation2 + $0x40] sm:$0xff]
    %v43 = vld [vmem:[#allocation2 + $0x48] sm:$0xff]
    %v44 = vld [vmem:[#allocation2 + $0x50] sm:$0xff]
    %v45 = vld [vmem:[#allocation2 + $0x58] sm:$0xff]
    %v46 = vld [vmem:[#allocation2 + $0x60] sm:$0xff]
    %v47 = vld [vmem:[#allocation2 + $0x68] sm:$0xff]
    %v48 = vld [vmem:[#allocation2 + $0x70] sm:$0xff]
    %v49 = vld [vmem:[#allocation2 + $0x78] sm:$0xff]
    %v50 = vld [vmem:[#allocation2 + $0x80] sm:$0xff]
    %v51 = vld [vmem:[#allocation2 + $0x88] sm:$0xff]
    %v52 = vld [vmem:[#allocation2 + $0x90] sm:$0xf]
    %v53 = vld [vmem:[#allocation2 + $0x98] sm:$0xf]
    %v54 = vld [vmem:[#allocation2 + $0xa0] sm:$0xf]
    %v55 = vld [vmem:[#allocation2 + $0xa8] sm:$0xf]
    %v56 = vld [vmem:[#allocation2 + $0xb0] sm:$0xf]
    %v57 = vld [vmem:[#allocation2 + $0xb8] sm:$0xf]
    %59 = vset.pattern.permute.xlu0 0
    %60 = vperm.xlu0 %59, %v30
    %v61 = vpop.permute.xlu0 %60
    %64 = vset.pattern.permute.xlu0 0
    %65 = vperm.xlu0 %64, %v31
    %v66 = vpop.permute.xlu0 %65
    %69 = vset.pattern.permute.xlu0 0
    %70 = vperm.xlu0 %69, %v32
    %v71 = vpop.permute.xlu0 %70
    %74 = vset.pattern.permute.xlu0 0
    %75 = vperm.xlu0 %74, %v33
    %v76 = vpop.permute.xlu0 %75
    %v78 = vmul.f32 %v61, %v34
    %v79 = vmul.f32 %v61, %v35
    %v80 = vmul.f32 %v61, %v36
    %v81 = vmul.f32 %v61, %v37
    %v82 = vmul.f32 %v61, %v38
    %v83 = vmul.f32 %v61, %v39
    %v84 = vmul.f32 %v66, %v40
    %v85 = vmul.f32 %v66, %v41
    %v86 = vmul.f32 %v66, %v42
    %v87 = vmul.f32 %v66, %v43
    %v88 = vmul.f32 %v66, %v44
    %v89 = vmul.f32 %v66, %v45
    %v90 = vmul.f32 %v71, %v46
    %v91 = vmul.f32 %v71, %v47
    %v92 = vmul.f32 %v71, %v48
    %v93 = vmul.f32 %v71, %v49
    %v94 = vmul.f32 %v71, %v50
    %v95 = vmul.f32 %v71, %v51
    %v96 = vmul.f32 %v76, %v52
    %v97 = vmul.f32 %v76, %v53
    %v98 = vmul.f32 %v76, %v54
    %v99 = vmul.f32 %v76, %v55
    %v100 = vmul.f32 %v76, %v56
    %v101 = vmul.f32 %v76, %v57
    %v102 = vld [vmem:[%s2] sm:$0x3f]
    %v103 = vadd.f32 %v78, %v84
    %v104 = vadd.f32 %v103, %v90
    %vm105 = vcmask 1043456
    %v106 = vsel %vm105, %v96, 0.0
    %v107 = vadd.f32 %v104, %v106
    %v108 = vrot.slane %v107, 4
    %v109 = vadd.f32 %v107, %v108
    %v110 = vrot.slane %v109, 2
    %v111 = vadd.f32 %v109, %v110
    %v112 = vrot.slane %v111, 1
    %v113 = vadd.f32 %v111, %v112
    %v114 = vadd.f32 %v79, %v85
    %v115 = vadd.f32 %v114, %v91
    %v116 = vsel %vm105, %v97, 0.0
    %v117 = vadd.f32 %v115, %v116
    %v118 = vrot.slane %v117, 4
    %v119 = vadd.f32 %v117, %v118
    %v120 = vrot.slane %v119, 2
    %v121 = vadd.f32 %v119, %v120
    %v122 = vrot.slane %v121, 1
    %v123 = vadd.f32 %v121, %v122
    %v124 = vadd.f32 %v80, %v86
    %v125 = vadd.f32 %v124, %v92
    %v126 = vsel %vm105, %v98, 0.0
    %v127 = vadd.f32 %v125, %v126
    %v128 = vrot.slane %v127, 4
    %v129 = vadd.f32 %v127, %v128
    %v130 = vrot.slane %v129, 2
    %v131 = vadd.f32 %v129, %v130
    %v132 = vrot.slane %v131, 1
    %v133 = vadd.f32 %v131, %v132
    %v134 = vadd.f32 %v81, %v87
    %v135 = vadd.f32 %v134, %v93
    %v136 = vsel %vm105, %v99, 0.0
    %v137 = vadd.f32 %v135, %v136
    %v138 = vrot.slane %v137, 4
    %v139 = vadd.f32 %v137, %v138
    %v140 = vrot.slane %v139, 2
    %v141 = vadd.f32 %v139, %v140
    %v142 = vrot.slane %v141, 1
    %v143 = vadd.f32 %v141, %v142
    %v144 = vadd.f32 %v82, %v88
    %v145 = vadd.f32 %v144, %v94
    %v146 = vsel %vm105, %v100, 0.0
    %v147 = vadd.f32 %v145, %v146
    %v148 = vrot.slane %v147, 4
    %v149 = vadd.f32 %v147, %v148
    %v150 = vrot.slane %v149, 2
    %v151 = vadd.f32 %v149, %v150
    %v152 = vrot.slane %v151, 1
    %v153 = vadd.f32 %v151, %v152
    %v154 = vadd.f32 %v83, %v89
    %v155 = vadd.f32 %v154, %v95
    %v156 = vsel %vm105, %v101, 0.0
    %v157 = vadd.f32 %v155, %v156
    %v158 = vrot.slane %v157, 4
    %v159 = vadd.f32 %v157, %v158
    %v160 = vrot.slane %v159, 2
    %v161 = vadd.f32 %v159, %v160
    %v162 = vrot.slane %v161, 1
    %v163 = vadd.f32 %v161, %v162
    %v170 = vrot.slane %v123, 7
    %v171 = vrot.slane %v133, 6
    %v172 = vrot.slane %v143, 5
    %v173 = vrot.slane %v153, 4
    %v174 = vrot.slane %v163, 3
    %vm175 = vcmask 1040384
    %v176 = vsel %vm175, %v113, %v170
    %vm177 = vcmask 1041408
    %v178 = vsel %vm177, %v176, %v171
    %vm179 = vcmask 1043459
    %v180 = vsel %vm179, %v172, %v173
    %vm181 = vcmask 1044483
    %v182 = vsel %vm181, %v180, %v174
    %vm183 = vcmask 1042432
    %v184 = vsel %vm183, %v178, %v182
    %v186 = vadd.f32 %v102, %v184
    %v187 = vmul.f32 %v186, 0.5
    %v188 = vtanh.pop %v187
    %v189 = vadd.f32 %v188, 1.0
    %v190 = vmul.f32 %v189, 0.5
    %v191 = vlaneseq
    %vm192 = vcmp.ge.s32.totalorder %v191, 0
    %vm193 = vcmp.lt.s32.totalorder %v191, 768
    %vm194 = vmand %vm192, %vm193
    %195 = vst.msk [vmem:[%s3] sm:$0x3f] %vm194, %v190
    // Predicated region
    $region18: #{conv2d_1x1_sigmoid.1} parent=1 // pred_check
      _
    $region19: #{conv2d_1x1_sigmoid.1} parent=1 // pred_check_branch
      %197 = sbr.rel (0) target = $region21
    $region20: #{conv2d_1x1_sigmoid.1} parent=1 // pred_region
      _
    $region21: #{conv2d_1x1_sigmoid.1} parent=1 // pred_fallthru
      _
    // Predicated region
    $region22: #{conv2d_1x1_sigmoid.1} parent=1 // pred_check
      _
    $region23: #{conv2d_1x1_sigmoid.1} parent=1 // pred_check_branch
      %199 = sbr.rel (0) target = $region25
    $region24: #{conv2d_1x1_sigmoid.1} parent=1 // pred_region
      _
    $region25: #{conv2d_1x1_sigmoid.1} parent=1 // pred_fallthru
      _
    %200 = vsyncpa [#allocation3], 1

</llo_original>
